<compile_context>
chip_gen: v6e
topology: v6e:2x2x1
jax: 0.10.0
libtpu: 0.0.40
codegen_flags: <defaults>
</compile_context>

<pallas_src>
import jax
import jax.numpy as jnp
from jax.experimental import pallas as pl
from jax.experimental.pallas import tpu as pltpu

HIDDEN = 256
LANE = 128      # vreg lane width
TB_MAX = 512    # target batch-tile rows for large B (~85% of HBM roofline regime)


def _round_up(n, m):
    return ((n + m - 1) // m) * m


def mlp_kernel(x_ref, w1_ref, b1_ref, w2_ref, b2_ref, out_ref):
    # fc1 on the MXU: bf16 x bf16 -> f32 accumulator.
    h = jnp.dot(x_ref[...], w1_ref[...], preferred_element_type=jnp.float32)
    # Bias + ReLU on the f32 accumulator (v5e VPU has no bf16 elementwise path).
    h = jnp.maximum(h + b1_ref[...], 0.0)
    # TODO(synk): training-mode dropout (PRNG mask * 1/(1-p)) not implemented;
    # forward here matches model.eval() semantics (dropout == identity).
    # Single downcast at the MXU boundary, then fc2: [TB, H] @ [H, Cp] -> f32.
    out = jnp.dot(h.astype(jnp.bfloat16), w2_ref[...],
                  preferred_element_type=jnp.float32)
    out = out + b2_ref[...]
    # Drop the lane padding of the class dim before the store: only B*C*4 bytes
    # of logits stream back to HBM (output array itself is unpadded).
    c = out_ref.shape[-1]
    out_ref[...] = out[:, :c].astype(out_ref.dtype)


def _choose_batch_tiling(B):
    """Even number of batch tiles (>=2) so both v7x TCs get equal work; tile
    rows rounded to 16 for clean bf16 sublane packing (v5e)."""
    n_tiles = max(2, 2 * pl.cdiv(B, 2 * TB_MAX))
    tb = _round_up(pl.cdiv(B, n_tiles), 16)
    return tb, n_tiles


def mlp_classifier(x, w1, b1, w2, b2):
    """Pallas forward for MLPClassifier (eval mode).

    x:  [B, D]        w1: [D, 256]   b1: [256]
    w2: [256, C]      b2: [C]        (weights pre-transposed to [in, out])
    Returns [B, C] float32 logits.
    """
    B, D = x.shape
    C = w2.shape[1]
    Cp = _round_up(C, LANE)

    TB, n_tiles = _choose_batch_tiling(B)
    Bp = TB * n_tiles

    # x: bf16 cast only (no D padding needed; block last dim == full array dim
    # is legal). Batch rows padded only when ragged; allow_input_fusion lets
    # XLA fuse this into the pallas_call instead of materializing a copy.
    xp = x.astype(jnp.bfloat16)
    if Bp != B:
        xp = jnp.pad(xp, ((0, Bp - B), (0, 0)))
    w1p = w1.astype(jnp.bfloat16)                              # [D, 256]
    b1p = b1.astype(jnp.float32).reshape(1, HIDDEN)
    # Keep 128-lane class padding on the MXU/bias *inputs* (lane-dense fc2
    # pass); the output keeps its real width C.
    w2p = jnp.zeros((HIDDEN, Cp), jnp.bfloat16).at[:, :C].set(w2.astype(jnp.bfloat16))
    b2p = jnp.zeros((1, Cp), jnp.float32).at[0, :C].set(b2.astype(jnp.float32))

    # Advisory cost so XLA overlaps the surrounding cast/pad/slice HLOs.
    flops = 2 * Bp * (D * HIDDEN + HIDDEN * Cp)
    bytes_accessed = (Bp * D * 2 + D * HIDDEN * 2 + HIDDEN * 4
                      + HIDDEN * Cp * 2 + Cp * 4 + Bp * C * 4)

    # VMEM budget: double-buffered x/out tiles + resident weights/biases +
    # fc1/fc2 intermediates. Capped at 48 MiB for headroom on v7x's 64 MiB/TC.
    vmem_bytes = (2 * TB * D * 2             # x tiles (bf16, double-buffered)
                  + 2 * TB * C * 4           # out tiles (f32, double-buffered)
                  + 2 * D * HIDDEN * 2       # w1
                  + 2 * HIDDEN * Cp * 2      # w2
                  + 2 * (HIDDEN + Cp) * 4    # biases
                  + TB * (HIDDEN + Cp) * 4)  # h + padded fc2 accumulator
    vmem_limit = min(48 << 20, max(8 << 20, 4 * vmem_bytes))

    out = pl.pallas_call(
        mlp_kernel,
        out_shape=jax.ShapeDtypeStruct((Bp, C), jnp.float32),
        grid_spec=pl.GridSpec(
            grid=(n_tiles,),
            in_specs=[
                pl.BlockSpec((TB, D), lambda i: (i, 0)),        # x: tiled over batch
                pl.BlockSpec((D, HIDDEN), lambda i: (0, 0)),    # weights VMEM-resident
                pl.BlockSpec((1, HIDDEN), lambda i: (0, 0)),
                pl.BlockSpec((HIDDEN, Cp), lambda i: (0, 0)),
                pl.BlockSpec((1, Cp), lambda i: (0, 0)),
            ],
            out_specs=pl.BlockSpec((TB, C), lambda i: (i, 0)),
        ),
        compiler_params=pltpu.CompilerParams(
            dimension_semantics=("parallel",),   # shard batch tiles across TCs (v7x)
            vmem_limit_bytes=vmem_limit,
            allow_input_fusion=[True, False, False, False, False],
        ),
        cost_estimate=pl.CostEstimate(flops=flops, transcendentals=0,
                                      bytes_accessed=bytes_accessed),
    )(xp, w1p, b1p, w2p, b2p)

    return out[:B]


def reference_bf16(x, w1, b1, w2, b2):
    """Reference with the same bf16-operand / f32-accumulate precision policy."""
    h = jnp.dot(x.astype(jnp.bfloat16), w1.astype(jnp.bfloat16),
                preferred_element_type=jnp.float32)
    h = jnp.maximum(h + b1, 0.0)
    return jnp.dot(h.astype(jnp.bfloat16), w2.astype(jnp.bfloat16),
                   preferred_element_type=jnp.float32) + b2


def reference_f32(x, w1, b1, w2, b2):
    h = jnp.maximum(x @ w1 + b1, 0.0)
    return h @ w2 + b2


if __name__ == "__main__":
    key = jax.random.PRNGKey(0)
    # Ragged batch (not a multiple of the tile) exercises batch padding and the
    # even two-tile split (TB=112, Bp=224 -> grid=(2,)) while staying small.
    B, INPUT_DIM, NUM_CLASSES = 200, 64, 8

    kx, k1, k2, k3, k4 = jax.random.split(key, 5)
    x = jax.random.normal(kx, (B, INPUT_DIM), dtype=jnp.float32)

    # Deterministic "Kaiming-uniform-ish" init, stored pre-transposed as [in, out].
    lim1 = 1.0 / (INPUT_DIM ** 0.5)
    w1 = jax.random.uniform(k1, (INPUT_DIM, HIDDEN), jnp.float32, -lim1, lim1)
    b1 = jax.random.uniform(k2, (HIDDEN,), jnp.float32, -lim1, lim1)
    lim2 = 1.0 / (HIDDEN ** 0.5)
    w2 = jax.random.uniform(k3, (HIDDEN, NUM_CLASSES), jnp.float32, -lim2, lim2)
    b2 = jax.random.uniform(k4, (NUM_CLASSES,), jnp.float32, -lim2, lim2)

    out = mlp_classifier(x, w1, b1, w2, b2)
    jax.block_until_ready(out)

    assert out.shape == (B, NUM_CLASSES)
    # Matches the kernel's precision policy tightly...
    ref_b = reference_bf16(x, w1, b1, w2, b2)
    assert jnp.allclose(out, ref_b, atol=2e-3, rtol=2e-3)
    # ...and the pure-f32 math within bf16 quantization tolerance.
    ref_f = reference_f32(x, w1, b1, w2, b2)
    assert jnp.allclose(out, ref_f, atol=5e-2, rtol=5e-2)
    print("KERNEL_OK")
</pallas_src>

<mosaic_0001>
module attributes {stable_mosaic.version = 11 : i64} {
  func.func @mlp_kernel(%arg0: i32, %arg1: memref<112x64xbf16, #tpu.memory_space<vmem>>, %arg2: memref<64x256xbf16, #tpu.memory_space<vmem>>, %arg3: memref<1x256xf32, #tpu.memory_space<vmem>>, %arg4: memref<256x128xbf16, #tpu.memory_space<vmem>>, %arg5: memref<1x128xf32, #tpu.memory_space<vmem>>, %arg6: memref<112x8xf32, #tpu.memory_space<vmem>>) attributes {dimension_semantics = [#tpu.dimension_semantics<parallel>], iteration_bounds = array<i64: 2>, scalar_prefetch = 0 : i64, scratch_operands = 0 : i64, tpu.core_type = #tpu.core_type<tc>, window_params = [{transform_indices = @transform_0, window_bounds = array<i64: 112, 64>}, {pipeline_mode = #tpu.pipeline_mode<synchronous>, transform_indices = @transform_1, window_bounds = array<i64: 64, 256>}, {pipeline_mode = #tpu.pipeline_mode<synchronous>, transform_indices = @transform_2, window_bounds = array<i64: 1, 256>}, {pipeline_mode = #tpu.pipeline_mode<synchronous>, transform_indices = @transform_3, window_bounds = array<i64: 256, 128>}, {pipeline_mode = #tpu.pipeline_mode<synchronous>, transform_indices = @transform_4, window_bounds = array<i64: 1, 128>}, {transform_indices = @transform_5, window_bounds = array<i64: 112, 8>}]} {
    %c0 = arith.constant 0 : index
    %c0_0 = arith.constant 0 : index
    %0 = vector.load %arg1[%c0, %c0_0] : memref<112x64xbf16, #tpu.memory_space<vmem>>, vector<112x64xbf16>
    %c0_1 = arith.constant 0 : index
    %c0_2 = arith.constant 0 : index
    %1 = vector.load %arg2[%c0_1, %c0_2] : memref<64x256xbf16, #tpu.memory_space<vmem>>, vector<64x256xbf16>
    %cst = arith.constant dense<0.000000e+00> : vector<112x256xf32>
    %2 = tpu.matmul %0, %1, %cst {dimension_numbers = #tpu.dot_dimension_numbers<[1], [0], [0], [1], [0, 0, 1, 1], [], []>} : vector<112x64xbf16>, vector<64x256xbf16>, vector<112x256xf32> -> vector<112x256xf32>
    %c0_3 = arith.constant 0 : index
    %c0_4 = arith.constant 0 : index
    %3 = vector.load %arg3[%c0_3, %c0_4] : memref<1x256xf32, #tpu.memory_space<vmem>>, vector<1x256xf32>
    %4 = vector.broadcast %3 : vector<1x256xf32> to vector<112x256xf32>
    %5 = arith.addf %2, %4 : vector<112x256xf32>
    %cst_5 = arith.constant 0.000000e+00 : f32
    %6 = vector.broadcast %cst_5 : f32 to vector<112x256xf32>
    %7 = arith.maximumf %5, %6 : vector<112x256xf32>
    %8 = arith.truncf %7 : vector<112x256xf32> to vector<112x256xbf16>
    %c0_6 = arith.constant 0 : index
    %c0_7 = arith.constant 0 : index
    %9 = vector.load %arg4[%c0_6, %c0_7] : memref<256x128xbf16, #tpu.memory_space<vmem>>, vector<256x128xbf16>
    %cst_8 = arith.constant dense<0.000000e+00> : vector<112x128xf32>
    %10 = tpu.matmul %8, %9, %cst_8 {dimension_numbers = #tpu.dot_dimension_numbers<[1], [0], [0], [1], [0, 0, 1, 1], [], []>} : vector<112x256xbf16>, vector<256x128xbf16>, vector<112x128xf32> -> vector<112x128xf32>
    %c0_9 = arith.constant 0 : index
    %c0_10 = arith.constant 0 : index
    %11 = vector.load %arg5[%c0_9, %c0_10] : memref<1x128xf32, #tpu.memory_space<vmem>>, vector<1x128xf32>
    %12 = vector.broadcast %11 : vector<1x128xf32> to vector<112x128xf32>
    %13 = arith.addf %10, %12 : vector<112x128xf32>
    %14 = vector.extract_strided_slice %13 {offsets = [0, 0], sizes = [112, 8], strides = [1, 1]} : vector<112x128xf32> to vector<112x8xf32>
    %c0_11 = arith.constant 0 : index
    %c0_12 = arith.constant 0 : index
    %15 = vector.load %arg6[%c0_11, %c0_12] : memref<112x8xf32, #tpu.memory_space<vmem>>, vector<112x8xf32>
    tpu.vector_store %arg6[%c0_11, %c0_12], %14 {strides = array<i32>} : memref<112x8xf32, #tpu.memory_space<vmem>>, vector<112x8xf32>,
    return
  }
  func.func @transform_0(%arg0: i32) -> (i32, i32) {
    %c0_i32 = arith.constant 0 : i32
    %c0_i32_0 = arith.constant 0 : i32
    return %arg0, %c0_i32 : i32, i32
  }
  func.func @transform_1(%arg0: i32) -> (i32, i32) {
    %c0_i32 = arith.constant 0 : i32
    %c0_i32_0 = arith.constant 0 : i32
    %c0_i32_1 = arith.constant 0 : i32
    return %c0_i32, %c0_i32_0 : i32, i32
  }
  func.func @transform_2(%arg0: i32) -> (i32, i32) {
    %c0_i32 = arith.constant 0 : i32
    %c0_i32_0 = arith.constant 0 : i32
    %c0_i32_1 = arith.constant 0 : i32
    return %c0_i32, %c0_i32_0 : i32, i32
  }
  func.func @transform_3(%arg0: i32) -> (i32, i32) {
    %c0_i32 = arith.constant 0 : i32
    %c0_i32_0 = arith.constant 0 : i32
    %c0_i32_1 = arith.constant 0 : i32
    return %c0_i32, %c0_i32_0 : i32, i32
  }
  func.func @transform_4(%arg0: i32) -> (i32, i32) {
    %c0_i32 = arith.constant 0 : i32
    %c0_i32_0 = arith.constant 0 : i32
    %c0_i32_1 = arith.constant 0 : i32
    return %c0_i32, %c0_i32_0 : i32, i32
  }
  func.func @transform_5(%arg0: i32) -> (i32, i32) {
    %c0_i32 = arith.constant 0 : i32
    %c0_i32_0 = arith.constant 0 : i32
    return %arg0, %c0_i32 : i32, i32
  }
}

</mosaic_0001>

<llo_original>
// kernel: tpu_custom_call.1
$region0: #{tpu_custom_call.1}
  #allocation0 [shape = 'u32[]', space=smem, size = 0x4, offset = 0x4, fixed_abs, tag = 'smem constant byte address 0x4 - core index']
  #allocation1 [shape = 'u32[144,128]{1,0:T(1,128)}', space=vmem, size = 0x12000, scoped, tag = 'internal scratch']
  %s0 = inlined_call_operand.vmem [shape: bf16[224,64], index: 0, kind: input, shape index: {}]
  %s1 = inlined_call_operand.hbm [shape: bf16[64,256], index: 1, kind: input, shape index: {}]
  %s2 = inlined_call_operand.vmem [shape: f32[1,256], index: 2, kind: input, shape index: {}]
  %s3 = inlined_call_operand.vmem [shape: bf16[256,128], index: 3, kind: input, shape index: {}]
  %s4 = inlined_call_operand.vmem [shape: f32[1,128], index: 4, kind: input, shape index: {}]
  %s5 = inlined_call_operand.vmem [shape: f32[224,8], index: 5, kind: output, shape index: {}]
  %s6 = sld [smem:[#allocation0]]
  $region57: #{tpu_custom_call.1} parent=0
    _
  %s8 = ssub.s32 1, %s6
  %s9 = scalar_select 0, %s8, %s6
  $region1: #{tpu_custom_call.1} parent=0
    #allocation2 [shape = 'u8[32768]{0}', space=vmem, size = 0x8000, scoped, tag = 'input window, operand 1, single buffered']
    #allocation3 [shape = 's32[2]{0}', space=sflag, size = 0x8, scoped, tag = 'scoped memory for tpu_custom_call.1']
    %10 = vsyncpa [#allocation3], 0
    loop: start=0, step=1, limit=4
    $region2: #{tpu_custom_call.1} parent=1 // loop_pre_header
      _
    $region3: #{tpu_custom_call.1} parent=1 // loop_header
      %s12 = sphi 0, %s16
      %p13 = scmp.ge.s32.totalorder %s12, 4
      %s22 = sphi 0, %s24
      %s25 = sphi 0, %s22
      %s26 = sphi 0, %s25
      %s42 = sphi 0, %s26
      %s46 = sphi 0, %s46
      %s48 = sphi 0, %s46
      %s49 = sphi 0, %s48
      %s63 = sphi 0, %s49
      %s67 = sphi 0, %s67
      %s69 = sphi 0, %s67
      %s70 = sphi 0, %s69
      %s84 = sphi 0, %s70
      %s88 = sphi 0, %s88
      %s90 = sphi 0, %s88
      %s91 = sphi 0, %s90
      %s105 = sphi 0, %s91
      %s109 = sphi 0, %s109
      %s111 = sphi 0, %s109
      %s112 = sphi 0, %s111
      %s126 = sphi 0, %s112
      %s132 = sphi 0, %s134
      %s135 = sphi 0, %s132
      %s136 = sphi 0, %s135
      %s152 = sphi 0, %s136
    $region4: #{tpu_custom_call.1} parent=1 // loop_header_branch
      %15 = sbr.rel (%p13) target = $region8
    $region5: #{tpu_custom_call.1} parent=1 // loop_body
      %s17 = ssub.s32 %s12, 1
      %s18 = ssub.s32 %s12, 2
      %s19 = sadd.s32 %s12, 1
      %s20 = ssub.s32 %s12, %s19
      %p21 = scmp.eq.s32.totalorder %s20, 0
      %s23 = sadd.s32 %s22, 1
      %s24 = scalar_select %p21, %s22, %s23
      %p27 = pneg %p21
      %p28 = scmp.eq.s32.totalorder %s12, 1
      %p29 = por %p27, %p28
      %p30 = scmp.ne.s32.totalorder %s22, %s25
      %p31 = scmp.eq.s32.totalorder %s12, 0
      %p32 = por %p30, %p31
      %p33 = scmp.ne.s32.totalorder %s22, %s25
      %p34 = scmp.eq.s32.totalorder %s17, 1
      %p35 = por %p33, %p34
      %p36 = scmp.ne.s32.totalorder %s25, %s26
      %p37 = scmp.eq.s32.totalorder %s17, 0
      %p38 = por %p36, %p37
      %p39 = scmp.ne.s32.totalorder %s25, %s26
      %p40 = scmp.eq.s32.totalorder %s18, 1
      %p41 = por %p39, %p40
      %p43 = scmp.ne.s32.totalorder %s26, %s42
      %p44 = scmp.eq.s32.totalorder %s18, 0
      %p45 = por %p43, %p44
      %s47 = sadd.s32 %s46, 1
      %p50 = scmp.eq.s32.totalorder %s12, 1
      %p51 = scmp.ne.s32.totalorder %s46, %s48
      %p52 = scmp.eq.s32.totalorder %s12, 0
      %p53 = por %p51, %p52
      %p54 = scmp.ne.s32.totalorder %s46, %s48
      %p55 = scmp.eq.s32.totalorder %s17, 1
      %p56 = por %p54, %p55
      %p57 = scmp.ne.s32.totalorder %s48, %s49
      %p58 = scmp.eq.s32.totalorder %s17, 0
      %p59 = por %p57, %p58
      %p60 = scmp.ne.s32.totalorder %s48, %s49
      %p61 = scmp.eq.s32.totalorder %s18, 1
      %p62 = por %p60, %p61
      %p64 = scmp.ne.s32.totalorder %s49, %s63
      %p65 = scmp.eq.s32.totalorder %s18, 0
      %p66 = por %p64, %p65
      %s68 = sadd.s32 %s67, 1
      %p71 = scmp.eq.s32.totalorder %s12, 1
      %p72 = scmp.ne.s32.totalorder %s67, %s69
      %p73 = scmp.eq.s32.totalorder %s12, 0
      %p74 = por %p72, %p73
      %p75 = scmp.ne.s32.totalorder %s67, %s69
      %p76 = scmp.eq.s32.totalorder %s17, 1
      %p77 = por %p75, %p76
      %p78 = scmp.ne.s32.totalorder %s69, %s70
      %p79 = scmp.eq.s32.totalorder %s17, 0
      %p80 = por %p78, %p79
      %p81 = scmp.ne.s32.totalorder %s69, %s70
      %p82 = scmp.eq.s32.totalorder %s18, 1
      %p83 = por %p81, %p82
      %p85 = scmp.ne.s32.totalorder %s70, %s84
      %p86 = scmp.eq.s32.totalorder %s18, 0
      %p87 = por %p85, %p86
      %s89 = sadd.s32 %s88, 1
      %p92 = scmp.eq.s32.totalorder %s12, 1
      %p93 = scmp.ne.s32.totalorder %s88, %s90
      %p94 = scmp.eq.s32.totalorder %s12, 0
      %p95 = por %p93, %p94
      %p96 = scmp.ne.s32.totalorder %s88, %s90
      %p97 = scmp.eq.s32.totalorder %s17, 1
      %p98 = por %p96, %p97
      %p99 = scmp.ne.s32.totalorder %s90, %s91
      %p100 = scmp.eq.s32.totalorder %s17, 0
      %p101 = por %p99, %p100
      %p102 = scmp.ne.s32.totalorder %s90, %s91
      %p103 = scmp.eq.s32.totalorder %s18, 1
      %p104 = por %p102, %p103
      %p106 = scmp.ne.s32.totalorder %s91, %s105
      %p107 = scmp.eq.s32.totalorder %s18, 0
      %p108 = por %p106, %p107
      %s110 = sadd.s32 %s109, 1
      %p113 = scmp.eq.s32.totalorder %s12, 1
      %p114 = scmp.ne.s32.totalorder %s109, %s111
      %p115 = scmp.eq.s32.totalorder %s12, 0
      %p116 = por %p114, %p115
      %p117 = scmp.ne.s32.totalorder %s109, %s111
      %p118 = scmp.eq.s32.totalorder %s17, 1
      %p119 = por %p117, %p118
      %p120 = scmp.ne.s32.totalorder %s111, %s112
      %p121 = scmp.eq.s32.totalorder %s17, 0
      %p122 = por %p120, %p121
      %p123 = scmp.ne.s32.totalorder %s111, %s112
      %p124 = scmp.eq.s32.totalorder %s18, 1
      %p125 = por %p123, %p124
      %p127 = scmp.ne.s32.totalorder %s112, %s126
      %p128 = scmp.eq.s32.totalorder %s18, 0
      %p129 = por %p127, %p128
      %s130 = ssub.s32 %s12, %s19
      %p131 = scmp.eq.s32.totalorder %s130, 0
      %s133 = sadd.s32 %s132, 1
      %s134 = scalar_select %p131, %s132, %s133
      %p137 = pneg %p131
      %p138 = scmp.eq.s32.totalorder %s12, 1
      %p139 = por %p137, %p138
      %p140 = scmp.ne.s32.totalorder %s132, %s135
      %p141 = scmp.eq.s32.totalorder %s12, 0
      %p142 = por %p140, %p141
      %p143 = scmp.ne.s32.totalorder %s132, %s135
      %p144 = scmp.eq.s32.totalorder %s17, 1
      %p145 = por %p143, %p144
      %p146 = scmp.ne.s32.totalorder %s135, %s136
      %p147 = scmp.eq.s32.totalorder %s17, 0
      %p148 = por %p146, %p147
      %p149 = scmp.ne.s32.totalorder %s135, %s136
      %p150 = scmp.eq.s32.totalorder %s18, 1
      %p151 = por %p149, %p150
      %p153 = scmp.ne.s32.totalorder %s136, %s152
      %p154 = scmp.eq.s32.totalorder %s18, 0
      %p155 = por %p153, %p154
      %p156 = scmp.le.s32.totalorder 1, %s12
      %p157 = scmp.lt.s32.totalorder %s12, 3
      %p158 = pnand %p156, %p157
      %p159 = pneg %p158
      // Predicated region
      $region9: #{tpu_custom_call.1} parent=5 // pred_check
        _
      $region10: #{tpu_custom_call.1} parent=5 // pred_check_branch
        %161 = sbr.rel (%p158) target = $region12
      $region11: #{tpu_custom_call.1} parent=5 // pred_region
        %s162 = ssub.s32 %s12, 1
        // Predicated region
        $region13: #{tpu_custom_call.1} parent=11 // pred_check
          %p163 = pneg %p59
        $region14: #{tpu_custom_call.1} parent=11 // pred_check_branch
          %165 = sbr.rel (%p163) target = $region16
        $region15: #{tpu_custom_call.1} parent=11 // pred_region
          %s167 = ssub.s32 1024, 1024
          %168 = vsyncadd [#allocation3], %s167
          %s169 = sshll.u32 [#allocation2], 4
          %s170 = int_to_ptr.vmem [resolvable:$true] %s169
          %175 = dma.hbm_to_vmem [thread:$0]  %s1, 1024, %s170, [#allocation3], 128, 128, 8
        $region16: #{tpu_custom_call.1} parent=11 // pred_fallthru
          _
        // Predicated region
        $region17: #{tpu_custom_call.1} parent=11 // pred_check
          %p176 = pneg %p80
        $region18: #{tpu_custom_call.1} parent=11 // pred_check_branch
          %178 = sbr.rel (%p176) target = $region20
        $region19: #{tpu_custom_call.1} parent=11 // pred_region
          _
        $region20: #{tpu_custom_call.1} parent=11 // pred_fallthru
          _
        // Predicated region
        $region21: #{tpu_custom_call.1} parent=11 // pred_check
          %p179 = pneg %p101
        $region22: #{tpu_custom_call.1} parent=11 // pred_check_branch
          %181 = sbr.rel (%p179) target = $region24
        $region23: #{tpu_custom_call.1} parent=11 // pred_region
          _
        $region24: #{tpu_custom_call.1} parent=11 // pred_fallthru
          _
        // Predicated region
        $region25: #{tpu_custom_call.1} parent=11 // pred_check
          %p182 = pneg %p122
        $region26: #{tpu_custom_call.1} parent=11 // pred_check_branch
          %184 = sbr.rel (%p182) target = $region28
        $region27: #{tpu_custom_call.1} parent=11 // pred_region
          _
        $region28: #{tpu_custom_call.1} parent=11 // pred_fallthru
          _
      $region12: #{tpu_custom_call.1} parent=5 // pred_fallthru
        _
      %p185 = scmp.lt.s32.totalorder %s12, 2
      // Predicated region
      $region29: #{tpu_custom_call.1} parent=5 // pred_check
        %p186 = pneg %p185
      $region30: #{tpu_custom_call.1} parent=5 // pred_check_branch
        %188 = sbr.rel (%p186) target = $region32
      $region31: #{tpu_custom_call.1} parent=5 // pred_region
        // Predicated region
        $region33: #{tpu_custom_call.1} parent=31 // pred_check
          %p189 = pneg %p32
        $region34: #{tpu_custom_call.1} parent=31 // pred_check_branch
          %191 = sbr.rel (%p189) target = $region36
        $region35: #{tpu_custom_call.1} parent=31 // pred_region
          %s192 = smul.u32 14, %s12
          %p193 = scmp.lt.s32.totalorder %s192, 27
          %s194 = scalar_select %p193, %s192, 27
          %s195 = smul.addr %s194, 4
          %s196 = scalar_lea.vmem %s0, %s195
          %s197 = smul.u32 14, %s12
        $region36: #{tpu_custom_call.1} parent=31 // pred_fallthru
          _
      $region32: #{tpu_custom_call.1} parent=5 // pred_fallthru
        _
      %p198 = scmp.le.s32.totalorder 1, %s12
      %p199 = scmp.lt.s32.totalorder %s12, 3
      %p200 = pnand %p198, %p199
      %p201 = pneg %p200
      // Predicated region
      $region37: #{tpu_custom_call.1} parent=5 // pred_check
        _
      $region38: #{tpu_custom_call.1} parent=5 // pred_check_branch
        %203 = sbr.rel (%p200) target = $region40
      $region39: #{tpu_custom_call.1} parent=5 // pred_region
        %s204 = ssub.s32 %s12, 1
        // Predicated region
        $region41: #{tpu_custom_call.1} parent=39 // pred_check
          %p205 = pneg %p59
        $region42: #{tpu_custom_call.1} parent=39 // pred_check_branch
          %207 = sbr.rel (%p205) target = $region44
        $region43: #{tpu_custom_call.1} parent=39 // pred_region
          %208 = dma.done [#allocation3], 1024
        $region44: #{tpu_custom_call.1} parent=39 // pred_fallthru
          _
        %s209 = smul.u32 14, %s17
        %p210 = scmp.lt.s32.totalorder %s209, 27
        %s211 = scalar_select %p210, %s209, 27
        %s212 = smul.addr %s211, 4
        %s213 = scalar_lea.vmem %s0, %s212
        %p214 = pneg %p38
        %p215 = pneg %p35
        %p216 = pneg %p59
        %p217 = pneg %p56
        %p218 = pneg %p80
        %p219 = pneg %p77
        %p220 = pneg %p101
        %p221 = pneg %p98
        %p222 = pneg %p122
        %p223 = pneg %p119
        %p224 = pneg %p148
        %p225 = pneg %p145
        %s226 = smul.u32 14, %s17
        %p227 = scmp.lt.s32.totalorder %s226, 27
        %s228 = scalar_select %p227, %s226, 27
        %s229 = smul.addr %s228, 8
        %s230 = scalar_lea.vmem %s5, %s229
        %s231 = smul.u32 14, %s17
        %p232 = scmp.lt.s32.totalorder %s231, 27
        %s233 = scalar_select %p232, %s231, 27
        %s234 = smul.addr %s233, 4
        %s235 = scalar_lea.vmem %s0, %s234
        %s236 = smul.u32 14, %s17
        %s237 = smul.u32 14, %s17
        %p238 = scmp.lt.s32.totalorder %s237, 27
        %s239 = scalar_select %p238, %s237, 27
        %s240 = smul.addr %s239, 8
        %s241 = scalar_lea.vmem %s5, %s240
        %s242 = smul.u32 14, %s17
        %v244 = vld [vmem:[%s235] sm:$0xf]
        %v245 = vld [vmem:[%s235 + $0x4] sm:$0xf]
        %v246 = vld [vmem:[%s235 + $0x8] sm:$0xf]
        %v247 = vld [vmem:[%s235 + $0xc] sm:$0xf]
        %v248 = vld [vmem:[%s235 + $0x10] sm:$0xf]
        %v249 = vld [vmem:[%s235 + $0x14] sm:$0xf]
        %v250 = vld [vmem:[%s235 + $0x18] sm:$0xf]
        %v251 = vld [vmem:[%s235 + $0x1c] sm:$0xf]
        %v252 = vld [vmem:[%s235 + $0x20] sm:$0xf]
        %v253 = vld [vmem:[%s235 + $0x24] sm:$0xf]
        %v254 = vld [vmem:[%s235 + $0x28] sm:$0xf]
        %v255 = vld [vmem:[%s235 + $0x2c] sm:$0xf]
        %v256 = vld [vmem:[%s235 + $0x30] sm:$0xf]
        %v257 = vld [vmem:[%s235 + $0x34] sm:$0xf]
        %v258 = vld [vmem:[#allocation2] sm:$0xff]
        %v259 = vld [vmem:[#allocation2 + $0x8] sm:$0xff]
        %v260 = vld [vmem:[#allocation2 + $0x10] sm:$0xff]
        %v261 = vld [vmem:[#allocation2 + $0x18] sm:$0xff]
        %v262 = vld [vmem:[#allocation2 + $0x20] sm:$0xff]
        %v263 = vld [vmem:[#allocation2 + $0x28] sm:$0xff]
        %v264 = vld [vmem:[#allocation2 + $0x30] sm:$0xff]
        %v265 = vld [vmem:[#allocation2 + $0x38] sm:$0xff]
        %v266 = vld [vmem:[%s2] sm:$0x3]
        %v268 = vlaneseq
        %v269 = vshrl.u32 %v268, 7
        %v270 = vsub.s32 0, %v269
        %v271 = vrot.slane %v266, %v270
        %v272 = vlaneseq
        %v273 = vshrl.u32 %v272, 7
        %v274 = vsub.s32 1, %v273
        %v275 = vrot.slane %v266, %v274
        %v292 = vunpack.c.l.b16 %v244
        %v293 = vunpack.c.l.b16 %v245
        %v294 = vunpack.c.l.b16 %v246
        %v295 = vunpack.c.l.b16 %v247
        %v296 = vunpack.c.l.b16 %v248
        %v297 = vunpack.c.l.b16 %v249
        %v298 = vunpack.c.l.b16 %v250
        %v299 = vunpack.c.l.b16 %v251
        %v300 = vunpack.c.l.b16 %v252
        %v301 = vunpack.c.l.b16 %v253
        %v302 = vunpack.c.l.b16 %v254
        %v303 = vunpack.c.l.b16 %v255
        %v304 = vunpack.c.l.b16 %v256
        %v305 = vunpack.c.l.b16 %v257
        %v306 = vpack.c.b16 %v293, %v292
        %v307 = vpack.c.b16 %v295, %v294
        %v308 = vpack.c.b16 %v297, %v296
        %v309 = vpack.c.b16 %v299, %v298
        %v310 = vpack.c.b16 %v301, %v300
        %v311 = vpack.c.b16 %v303, %v302
        %v312 = vpack.c.b16 %v305, %v304
        %v321 = vunpack.c.l.b16 %v258
        %v322 = vunpack.c.h.b16 %v258
        %v323 = vunpack.c.l.b16 %v259
        %v324 = vunpack.c.h.b16 %v259
        %v325 = vunpack.c.l.b16 %v260
        %v326 = vunpack.c.h.b16 %v260
        %v327 = vunpack.c.l.b16 %v261
        %v328 = vunpack.c.h.b16 %v261
        %v329 = vunpack.c.l.b16 %v262
        %v330 = vunpack.c.h.b16 %v262
        %v331 = vunpack.c.l.b16 %v263
        %v332 = vunpack.c.h.b16 %v263
        %v333 = vunpack.c.l.b16 %v264
        %v334 = vunpack.c.h.b16 %v264
        %v335 = vunpack.c.l.b16 %v265
        %v336 = vunpack.c.h.b16 %v265
        %v337 = vpack.c.b16 %v323, %v321
        %v338 = vpack.c.b16 %v324, %v322
        %v339 = vpack.c.b16 %v327, %v325
        %v340 = vpack.c.b16 %v328, %v326
        %v341 = vpack.c.b16 %v331, %v329
        %v342 = vpack.c.b16 %v332, %v330
        %v343 = vpack.c.b16 %v335, %v333
        %v344 = vpack.c.b16 %v336, %v334
        %vm353 = vcmask 523264
        %v355 = vsel %vm353, %v306, 0
        %v358 = vsel %vm353, %v307, 0
        %v361 = vsel %vm353, %v308, 0
        %v364 = vsel %vm353, %v309, 0
        %v367 = vsel %vm353, %v310, 0
        %v370 = vsel %vm353, %v311, 0
        %v373 = vsel %vm353, %v312, 0
        %375 = vmatprep.subr.bf16.mxu0 0
        %376 = vmatpush1.bf16.msra.mxu0 0
        %377 = vmatprep.subr.bf16.mxu0 0
        %378 = vmatpush1.bf16.msra.mxu0 0
        %379 = vmatprep.subr.bf16.mxu0 0
        %380 = vmatpush1.bf16.msra.mxu0 0
        %381 = vmatprep.subr.bf16.mxu0 0
        %382 = vmatpush1.bf16.msra.mxu0 0
        %383 = vmatprep.subr.bf16.mxu0 %v344
        %384 = vmatpush1.bf16.msra.mxu0 %v343
        %385 = vmatprep.subr.bf16.mxu0 %v342
        %386 = vmatpush1.bf16.msra.mxu0 %v341
        %387 = vmatprep.subr.bf16.mxu0 %v340
        %388 = vmatpush1.bf16.msra.mxu0 %v339
        %389 = vmatprep.subr.bf16.mxu0 %v338
        %390 = vmatpush1.bf16.msra.mxu0 %v337
        %391 = vmatprep.subr.bf16.mxu0 0
        %392 = vmatpush2.bf16.msra.mxu0 0
        %393 = vmatprep.subr.bf16.mxu0 0
        %394 = vmatpush2.bf16.msra.mxu0 0
        %395 = vmatprep.subr.bf16.mxu0 0
        %396 = vmatpush2.bf16.msra.mxu0 0
        %397 = vmatprep.subr.bf16.mxu0 0
        %398 = vmatpush2.bf16.msra.mxu0 0
        %399 = vmatprep.subr.bf16.mxu0 0
        %400 = vmatpush2.bf16.msra.mxu0 0
        %401 = vmatprep.subr.bf16.mxu0 0
        %402 = vmatpush2.bf16.msra.mxu0 0
        %403 = vmatprep.subr.bf16.mxu0 0
        %404 = vmatpush2.bf16.msra.mxu0 0
        %405 = vmatprep.subr.bf16.mxu0 0
        %406 = vmatpush2.bf16.msra.mxu0 0
        %407 = vmatprep.mubr.bf16.mxu0 0
        %408 = vmatmul.mubr.bf16.gmra.mxu0 %v355
        %v409 = vpop.f32.mrf.mxu0
        %v410 = vadd.f32 %v271, %v409
        %v411 = vpop.f32.mrf.mxu0
        %v412 = vadd.f32 %v275, %v411
        %v413 = vpop.f32.mrf.mxu0
        %v414 = vadd.f32 %v271, %v413
        %v415 = vpop.f32.mrf.mxu0
        %v416 = vadd.f32 %v275, %v415
        %417 = vmatprep.mubr.bf16.mxu0 0
        %418 = vmatmul.mubr.bf16.gmra.mxu0 %v358
        %v419 = vpop.f32.mrf.mxu0
        %v420 = vadd.f32 %v271, %v419
        %v421 = vpop.f32.mrf.mxu0
        %v422 = vadd.f32 %v275, %v421
        %v423 = vpop.f32.mrf.mxu0
        %v424 = vadd.f32 %v271, %v423
        %v425 = vpop.f32.mrf.mxu0
        %v426 = vadd.f32 %v275, %v425
        %427 = vmatprep.mubr.bf16.mxu0 0
        %428 = vmatmul.mubr.bf16.gmra.mxu0 %v361
        %v429 = vpop.f32.mrf.mxu0
        %v430 = vadd.f32 %v271, %v429
        %v431 = vpop.f32.mrf.mxu0
        %v432 = vadd.f32 %v275, %v431
        %v433 = vpop.f32.mrf.mxu0
        %v434 = vadd.f32 %v271, %v433
        %v435 = vpop.f32.mrf.mxu0
        %v436 = vadd.f32 %v275, %v435
        %437 = vmatprep.mubr.bf16.mxu0 0
        %438 = vmatmul.mubr.bf16.gmra.mxu0 %v364
        %v439 = vpop.f32.mrf.mxu0
        %v440 = vadd.f32 %v271, %v439
        %v441 = vpop.f32.mrf.mxu0
        %v442 = vadd.f32 %v275, %v441
        %v443 = vpop.f32.mrf.mxu0
        %v444 = vadd.f32 %v271, %v443
        %v445 = vpop.f32.mrf.mxu0
        %v446 = vadd.f32 %v275, %v445
        %447 = vmatprep.mubr.bf16.mxu0 0
        %448 = vmatmul.mubr.bf16.gmra.mxu0 %v367
        %v449 = vpop.f32.mrf.mxu0
        %v450 = vadd.f32 %v271, %v449
        %v451 = vpop.f32.mrf.mxu0
        %v452 = vadd.f32 %v275, %v451
        %v453 = vpop.f32.mrf.mxu0
        %v454 = vadd.f32 %v271, %v453
        %v455 = vpop.f32.mrf.mxu0
        %v456 = vadd.f32 %v275, %v455
        %457 = vmatprep.mubr.bf16.mxu0 0
        %458 = vmatmul.mubr.bf16.gmra.mxu0 %v370
        %v459 = vpop.f32.mrf.mxu0
        %v460 = vadd.f32 %v271, %v459
        %v461 = vpop.f32.mrf.mxu0
        %v462 = vadd.f32 %v275, %v461
        %v463 = vpop.f32.mrf.mxu0
        %v464 = vadd.f32 %v271, %v463
        %v465 = vpop.f32.mrf.mxu0
        %v466 = vadd.f32 %v275, %v465
        %467 = vmatprep.mubr.bf16.mxu0 0
        %468 = vmatmul.mubr.bf16.gmra.mxu0 %v373
        %v469 = vpop.f32.mrf.mxu0
        %v470 = vadd.f32 %v271, %v469
        %v471 = vpop.f32.mrf.mxu0
        %v472 = vadd.f32 %v275, %v471
        %v473 = vpop.f32.mrf.mxu0
        %v474 = vadd.f32 %v271, %v473
        %v475 = vpop.f32.mrf.mxu0
        %v476 = vadd.f32 %v275, %v475
        %477 = vdwg.mxu0
        %v478 = vmax.f32 %v410, 0.0
        %v479 = vmax.f32 %v412, 0.0
        %v480 = vmax.f32 %v414, 0.0
        %v481 = vmax.f32 %v416, 0.0
        %v482 = vmax.f32 %v420, 0.0
        %v483 = vmax.f32 %v422, 0.0
        %v484 = vmax.f32 %v424, 0.0
        %v485 = vmax.f32 %v426, 0.0
        %v486 = vmax.f32 %v430, 0.0
        %v487 = vmax.f32 %v432, 0.0
        %v488 = vmax.f32 %v434, 0.0
        %v489 = vmax.f32 %v436, 0.0
        %v490 = vmax.f32 %v440, 0.0
        %v491 = vmax.f32 %v442, 0.0
        %v492 = vmax.f32 %v444, 0.0
        %v493 = vmax.f32 %v446, 0.0
        %v494 = vmax.f32 %v450, 0.0
        %v495 = vmax.f32 %v452, 0.0
        %v496 = vmax.f32 %v454, 0.0
        %v497 = vmax.f32 %v456, 0.0
        %v498 = vmax.f32 %v460, 0.0
        %v499 = vmax.f32 %v462, 0.0
        %v500 = vmax.f32 %v464, 0.0
        %v501 = vmax.f32 %v466, 0.0
        %v502 = vmax.f32 %v470, 0.0
        %v503 = vmax.f32 %v472, 0.0
        %v504 = vmax.f32 %v474, 0.0
        %v505 = vmax.f32 %v476, 0.0
        %v506 = vpack.c.bf16 %v480, %v478
        %v507 = vpack.c.bf16 %v481, %v479
        %v508 = vpack.c.bf16 %v484, %v482
        %v509 = vpack.c.bf16 %v485, %v483
        %v510 = vpack.c.bf16 %v488, %v486
        %v511 = vpack.c.bf16 %v489, %v487
        %v512 = vpack.c.bf16 %v492, %v490
        %v513 = vpack.c.bf16 %v493, %v491
        %v514 = vpack.c.bf16 %v496, %v494
        %v515 = vpack.c.bf16 %v497, %v495
        %v516 = vpack.c.bf16 %v500, %v498
        %v517 = vpack.c.bf16 %v501, %v499
        %v518 = vpack.c.bf16 %v504, %v502
        %v519 = vpack.c.bf16 %v505, %v503
        %v520 = vld [vmem:[%s3] sm:$0xf]
        %v521 = vld [vmem:[%s3 + $0x4] sm:$0xf]
        %v522 = vld [vmem:[%s3 + $0x8] sm:$0xf]
        %v523 = vld [vmem:[%s3 + $0xc] sm:$0xf]
        %v524 = vld [vmem:[%s3 + $0x10] sm:$0xf]
        %v525 = vld [vmem:[%s3 + $0x14] sm:$0xf]
        %v526 = vld [vmem:[%s3 + $0x18] sm:$0xf]
        %v527 = vld [vmem:[%s3 + $0x1c] sm:$0xf]
        %v528 = vld [vmem:[%s3 + $0x20] sm:$0xf]
        %v529 = vld [vmem:[%s3 + $0x24] sm:$0xf]
        %v530 = vld [vmem:[%s3 + $0x28] sm:$0xf]
        %v531 = vld [vmem:[%s3 + $0x2c] sm:$0xf]
        %v532 = vld [vmem:[%s3 + $0x30] sm:$0xf]
        %v533 = vld [vmem:[%s3 + $0x34] sm:$0xf]
        %v534 = vld [vmem:[%s3 + $0x38] sm:$0xf]
        %v535 = vld [vmem:[%s3 + $0x3c] sm:$0xf]
        %v536 = vld [vmem:[%s3 + $0x40] sm:$0xf]
        %v537 = vld [vmem:[%s3 + $0x44] sm:$0xf]
        %v538 = vld [vmem:[%s3 + $0x48] sm:$0xf]
        %v539 = vld [vmem:[%s3 + $0x4c] sm:$0xf]
        %v540 = vld [vmem:[%s3 + $0x50] sm:$0xf]
        %v541 = vld [vmem:[%s3 + $0x54] sm:$0xf]
        %v542 = vld [vmem:[%s3 + $0x58] sm:$0xf]
        %v543 = vld [vmem:[%s3 + $0x5c] sm:$0xf]
        %v544 = vld [vmem:[%s3 + $0x60] sm:$0xf]
        %v545 = vld [vmem:[%s3 + $0x64] sm:$0xf]
        %v546 = vld [vmem:[%s3 + $0x68] sm:$0xf]
        %v547 = vld [vmem:[%s3 + $0x6c] sm:$0xf]
        %v548 = vld [vmem:[%s3 + $0x70] sm:$0xf]
        %v549 = vld [vmem:[%s3 + $0x74] sm:$0xf]
        %v550 = vld [vmem:[%s3 + $0x78] sm:$0xf]
        %v551 = vld [vmem:[%s3 + $0x7c] sm:$0xf]
        %v552 = vld [vmem:[%s4] sm:$0x1]
        %v554 = vlaneseq
        %v555 = vshrl.u32 %v554, 7
        %v556 = vsub.s32 0, %v555
        %v557 = vrot.slane %v552, %v556
        %v591 = vunpack.c.l.b16 %v520
        %v592 = vunpack.c.l.b16 %v521
        %v593 = vunpack.c.l.b16 %v522
        %v594 = vunpack.c.l.b16 %v523
        %v595 = vunpack.c.l.b16 %v524
        %v596 = vunpack.c.l.b16 %v525
        %v597 = vunpack.c.l.b16 %v526
        %v598 = vunpack.c.l.b16 %v527
        %v599 = vunpack.c.l.b16 %v528
        %v600 = vunpack.c.l.b16 %v529
        %v601 = vunpack.c.l.b16 %v530
        %v602 = vunpack.c.l.b16 %v531
        %v603 = vunpack.c.l.b16 %v532
        %v604 = vunpack.c.l.b16 %v533
        %v605 = vunpack.c.l.b16 %v534
        %v606 = vunpack.c.l.b16 %v535
        %v607 = vunpack.c.l.b16 %v536
        %v608 = vunpack.c.l.b16 %v537
        %v609 = vunpack.c.l.b16 %v538
        %v610 = vunpack.c.l.b16 %v539
        %v611 = vunpack.c.l.b16 %v540
        %v612 = vunpack.c.l.b16 %v541
        %v613 = vunpack.c.l.b16 %v542
        %v614 = vunpack.c.l.b16 %v543
        %v615 = vunpack.c.l.b16 %v544
        %v616 = vunpack.c.l.b16 %v545
        %v617 = vunpack.c.l.b16 %v546
        %v618 = vunpack.c.l.b16 %v547
        %v619 = vunpack.c.l.b16 %v548
        %v620 = vunpack.c.l.b16 %v549
        %v621 = vunpack.c.l.b16 %v550
        %v622 = vunpack.c.l.b16 %v551
        %v623 = vpack.c.b16 %v592, %v591
        %v624 = vpack.c.b16 %v594, %v593
        %v625 = vpack.c.b16 %v596, %v595
        %v626 = vpack.c.b16 %v598, %v597
        %v627 = vpack.c.b16 %v600, %v599
        %v628 = vpack.c.b16 %v602, %v601
        %v629 = vpack.c.b16 %v604, %v603
        %v630 = vpack.c.b16 %v606, %v605
        %v631 = vpack.c.b16 %v608, %v607
        %v632 = vpack.c.b16 %v610, %v609
        %v633 = vpack.c.b16 %v612, %v611
        %v634 = vpack.c.b16 %v614, %v613
        %v635 = vpack.c.b16 %v616, %v615
        %v636 = vpack.c.b16 %v618, %v617
        %v637 = vpack.c.b16 %v620, %v619
        %v638 = vpack.c.b16 %v622, %v621
        %655 = vmatprep.subr.bf16.mxu0 0
        %656 = vmatpush1.bf16.msra.mxu0 %v630
        %657 = vmatprep.subr.bf16.mxu0 0
        %658 = vmatpush1.bf16.msra.mxu0 %v629
        %659 = vmatprep.subr.bf16.mxu0 0
        %660 = vmatpush1.bf16.msra.mxu0 %v628
        %661 = vmatprep.subr.bf16.mxu0 0
        %662 = vmatpush1.bf16.msra.mxu0 %v627
        %663 = vmatprep.subr.bf16.mxu0 0
        %664 = vmatpush1.bf16.msra.mxu0 %v626
        %665 = vmatprep.subr.bf16.mxu0 0
        %666 = vmatpush1.bf16.msra.mxu0 %v625
        %667 = vmatprep.subr.bf16.mxu0 0
        %668 = vmatpush1.bf16.msra.mxu0 %v624
        %669 = vmatprep.subr.bf16.mxu0 0
        %670 = vmatpush1.bf16.msra.mxu0 %v623
        %671 = vmatprep.subr.bf16.mxu0 0
        %672 = vmatpush2.bf16.msra.mxu0 %v638
        %673 = vmatprep.subr.bf16.mxu0 0
        %674 = vmatpush2.bf16.msra.mxu0 %v637
        %675 = vmatprep.subr.bf16.mxu0 0
        %676 = vmatpush2.bf16.msra.mxu0 %v636
        %677 = vmatprep.subr.bf16.mxu0 0
        %678 = vmatpush2.bf16.msra.mxu0 %v635
        %679 = vmatprep.subr.bf16.mxu0 0
        %680 = vmatpush2.bf16.msra.mxu0 %v634
        %681 = vmatprep.subr.bf16.mxu0 0
        %682 = vmatpush2.bf16.msra.mxu0 %v633
        %683 = vmatprep.subr.bf16.mxu0 0
        %684 = vmatpush2.bf16.msra.mxu0 %v632
        %685 = vmatprep.subr.bf16.mxu0 0
        %686 = vmatpush2.bf16.msra.mxu0 %v631
        %687 = vmatprep.mubr.bf16.mxu0 %v507
        %688 = vmatmul.mubr.bf16.gmra.mxu0 %v506
        %v689 = vpop.f32.mrf.mxu0
        %v690 = vadd.f32 %v557, %v689
        %v691 = vpop.f32.mrf.mxu0
        %v692 = vpop.f32.mrf.mxu0
        %v693 = vadd.f32 %v557, %v692
        %v694 = vpop.f32.mrf.mxu0
        %695 = vmatprep.mubr.bf16.mxu0 %v509
        %696 = vmatmul.mubr.bf16.gmra.mxu0 %v508
        %v697 = vpop.f32.mrf.mxu0
        %v698 = vadd.f32 %v557, %v697
        %v699 = vpop.f32.mrf.mxu0
        %v700 = vpop.f32.mrf.mxu0
        %v701 = vadd.f32 %v557, %v700
        %v702 = vpop.f32.mrf.mxu0
        %703 = vmatprep.mubr.bf16.mxu0 %v511
        %704 = vmatmul.mubr.bf16.gmra.mxu0 %v510
        %v705 = vpop.f32.mrf.mxu0
        %v706 = vadd.f32 %v557, %v705
        %v707 = vpop.f32.mrf.mxu0
        %v708 = vpop.f32.mrf.mxu0
        %v709 = vadd.f32 %v557, %v708
        %v710 = vpop.f32.mrf.mxu0
        %711 = vmatprep.mubr.bf16.mxu0 %v513
        %712 = vmatmul.mubr.bf16.gmra.mxu0 %v512
        %v713 = vpop.f32.mrf.mxu0
        %v714 = vadd.f32 %v557, %v713
        %v715 = vpop.f32.mrf.mxu0
        %v716 = vpop.f32.mrf.mxu0
        %v717 = vadd.f32 %v557, %v716
        %v718 = vpop.f32.mrf.mxu0
        %719 = vmatprep.mubr.bf16.mxu0 %v515
        %720 = vmatmul.mubr.bf16.gmra.mxu0 %v514
        %v721 = vpop.f32.mrf.mxu0
        %v722 = vadd.f32 %v557, %v721
        %v723 = vpop.f32.mrf.mxu0
        %v724 = vpop.f32.mrf.mxu0
        %v725 = vadd.f32 %v557, %v724
        %v726 = vpop.f32.mrf.mxu0
        %727 = vmatprep.mubr.bf16.mxu0 %v517
        %728 = vmatmul.mubr.bf16.gmra.mxu0 %v516
        %v729 = vpop.f32.mrf.mxu0
        %v730 = vadd.f32 %v557, %v729
        %v731 = vpop.f32.mrf.mxu0
        %v732 = vpop.f32.mrf.mxu0
        %v733 = vadd.f32 %v557, %v732
        %v734 = vpop.f32.mrf.mxu0
        %735 = vmatprep.mubr.bf16.mxu0 %v519
        %736 = vmatmul.mubr.bf16.gmra.mxu0 %v518
        %v737 = vpop.f32.mrf.mxu0
        %v738 = vadd.f32 %v557, %v737
        %v739 = vpop.f32.mrf.mxu0
        %v740 = vpop.f32.mrf.mxu0
        %v741 = vadd.f32 %v557, %v740
        %v742 = vpop.f32.mrf.mxu0
        %743 = vdwg.mxu0
        %vm744 = vcmask 64512
        %745 = vst.msk [vmem:[%s241] sm:$0xff] %vm744, %v690
        %746 = vst.msk [vmem:[%s241 + $0x8] sm:$0xff] %vm744, %v693
        %747 = vst.msk [vmem:[%s241 + $0x10] sm:$0xff] %vm744, %v698
        %748 = vst.msk [vmem:[%s241 + $0x18] sm:$0xff] %vm744, %v701
        %749 = vst.msk [vmem:[%s241 + $0x20] sm:$0xff] %vm744, %v706
        %750 = vst.msk [vmem:[%s241 + $0x28] sm:$0xff] %vm744, %v709
        %751 = vst.msk [vmem:[%s241 + $0x30] sm:$0xff] %vm744, %v714
        %752 = vst.msk [vmem:[%s241 + $0x38] sm:$0xff] %vm744, %v717
        %753 = vst.msk [vmem:[%s241 + $0x40] sm:$0xff] %vm744, %v722
        %754 = vst.msk [vmem:[%s241 + $0x48] sm:$0xff] %vm744, %v725
        %755 = vst.msk [vmem:[%s241 + $0x50] sm:$0xff] %vm744, %v730
        %756 = vst.msk [vmem:[%s241 + $0x58] sm:$0xff] %vm744, %v733
        %757 = vst.msk [vmem:[%s241 + $0x60] sm:$0xff] %vm744, %v738
        %758 = vst.msk [vmem:[%s241 + $0x68] sm:$0xff] %vm744, %v741
        %s759 = smul.u32 14, %s17
        %p760 = scmp.lt.s32.totalorder %s759, 27
        %s761 = scalar_select %p760, %s759, 27
        %s762 = smul.addr %s761, 8
        %s763 = scalar_lea.vmem %s5, %s762
        // Predicated region
        $region45: #{tpu_custom_call.1} parent=39 // pred_check
          %p764 = pneg %p145
        $region46: #{tpu_custom_call.1} parent=39 // pred_check_branch
          %766 = sbr.rel (%p764) target = $region48
        $region47: #{tpu_custom_call.1} parent=39 // pred_region
          %s767 = smul.u32 14, %s17
        $region48: #{tpu_custom_call.1} parent=39 // pred_fallthru
          _
      $region40: #{tpu_custom_call.1} parent=5 // pred_fallthru
        _
      %p768 = scmp.le.s32.totalorder 2, %s12
      // Predicated region
      $region49: #{tpu_custom_call.1} parent=5 // pred_check
        %p769 = pneg %p768
      $region50: #{tpu_custom_call.1} parent=5 // pred_check_branch
        %771 = sbr.rel (%p769) target = $region52
      $region51: #{tpu_custom_call.1} parent=5 // pred_region
        %s772 = ssub.s32 %s12, 2
        // Predicated region
        $region53: #{tpu_custom_call.1} parent=51 // pred_check
          %p773 = pneg %p151
        $region54: #{tpu_custom_call.1} parent=51 // pred_check_branch
          %775 = sbr.rel (%p773) target = $region56
        $region55: #{tpu_custom_call.1} parent=51 // pred_region
          %s776 = smul.u32 14, %s18
          %p777 = scmp.lt.s32.totalorder %s776, 27
          %s778 = scalar_select %p777, %s776, 27
          %s779 = smul.addr %s778, 8
          %s780 = scalar_lea.vmem %s5, %s779
        $region56: #{tpu_custom_call.1} parent=51 // pred_fallthru
          _
      $region52: #{tpu_custom_call.1} parent=5 // pred_fallthru
        _
    $region6: #{tpu_custom_call.1} parent=1 // loop_footer
      %s16 = sadd.s32 1, %s12
    $region7: #{tpu_custom_call.1} parent=1 // loop_footer_branch
      %11 = sbr.rel target = $region3
    $region8: #{tpu_custom_call.1} parent=1 // loop_exit
      _
    %781 = vsyncpa [#allocation3], 1
    %s782 = scalar_lea.sflag [#allocation3], 1
    %783 = vsyncpa %s782, 1

</llo_original>
